<compile_context>
chip_gen: v7x
topology: tpu7x:2x2x1
jax: 0.10.0
libtpu: 0.0.40
codegen_flags: <defaults>
</compile_context>

<pallas_src>
import functools

import jax
import jax.numpy as jnp
from jax import lax
from jax.experimental import pallas as pl
from jax.experimental.pallas import tpu as pltpu

BN_EPS = 1e-5


def _round_up(v, m):
    return -(-v // m) * m


def _pad2(a, rows, cols):
    r, c = a.shape
    return jnp.pad(a, ((0, rows - r), (0, cols - c)))


def _chip_tuning():
    """Per-generation (node-tile cap, scoped-VMEM limit)."""
    try:
        kind = jax.devices()[0].device_kind.lower()
    except Exception:
        kind = ""
    if "v6" in kind:                     # v6e: 128 MiB physical VMEM
        return 8192, 64 * 1024 * 1024
    if "v5" in kind:                     # v5e: single vst slot -> moderate tiles
        return 2048, 32 * 1024 * 1024
    return 4096, 32 * 1024 * 1024        # v7x (64 MiB VMEM) / unknown


# -----------------------------------------------------------------------------
# Fused kernel (per node tile):
#   h1  = x @ W01 + b01          (node-BN + GNN stand-in + lin1 folded, MXU)
#   a   = swish(h1)              (f32 on VPU/EUP; dropout is identity in eval)
#   h2  = a @ W2 + b2            (MXU bf16, f32 accumulate)
#   out += onehot(batch)^T @ h2  (global_add_pool as an f32 MXU segment-sum)
# -----------------------------------------------------------------------------
def _fused_kernel(x_ref, seg_ref, w01_ref, b01_ref, w2_ref, b2_ref, out_ref):
    i = pl.program_id(1)                 # accumulation axis (node tiles)

    @pl.when(i == 0)
    def _():
        out_ref[...] = jnp.zeros_like(out_ref)

    x = x_ref[...]                                             # [T, x_dim] bf16
    h1 = jnp.dot(x, w01_ref[...],
                 preferred_element_type=jnp.float32) + b01_ref[...]
    a = h1 * jax.nn.sigmoid(h1)                                # swish, f32
    # Dropout(p=0.25) is identity in eval mode.
    h2 = jnp.dot(a.astype(jnp.bfloat16), w2_ref[...],
                 preferred_element_type=jnp.float32) + b2_ref[...]   # [T, Dp] f32

    seg = seg_ref[...]                                         # [1, T] int32
    g_pad = out_ref.shape[0]
    t = seg.shape[1]
    gids = lax.broadcasted_iota(jnp.int32, (g_pad, t), 0)
    onehot = (seg == gids).astype(jnp.float32)                 # [Gp, T]
    # f32 pooling keeps global_add_pool at PyTorch precision.
    out_ref[...] += jnp.dot(onehot, h2, preferred_element_type=jnp.float32)


# -----------------------------------------------------------------------------
# Full forward (eval mode), mirroring MolKGNNNet.forward, in ONE pallas_call.
# -----------------------------------------------------------------------------
def mol_kgnn_forward(x, edge_attr, batch_idx, num_graphs, params):
    # TODO(synk): edge_batch_norm(edge_attr) only feeds MolGCN; compute it
    # inside that kernel (edge feature axis padded to 128 lanes) when it lands.
    del edge_attr

    n, x_dim = x.shape
    dg = params["w1"].shape[1]

    f32 = jnp.float32
    tile_cap, vmem_limit = _chip_tuning()

    # --- tiling geometry ------------------------------------------------------
    d_pad = _round_up(dg, 128)
    g_pad = _round_up(max(num_graphs, 1), 8)
    tile_n = min(_round_up(n, 16), tile_cap)        # tile_cap is 128-aligned
    num_tiles = -(-n // tile_n)
    cores_split = 2 if num_tiles >= 2 else 1        # dual-TC split (v7x)
    tiles_per_core = -(-num_tiles // cores_split)
    n_pad = cores_split * tiles_per_core * tile_n

    # --- fold node BN + linear GNN stand-in + lin1 into ONE matmul -----------
    scale = params["node_bn_gamma"].astype(f32) * lax.rsqrt(
        params["node_bn_rv"].astype(f32) + BN_EPS)
    shift = params["node_bn_beta"].astype(f32) - params["node_bn_rm"].astype(f32) * scale
    wg_f = scale[:, None] * params["wg"].astype(f32)              # [x_dim, K]
    bg_f = shift[None, :] @ params["wg"].astype(f32) + params["bg"].astype(f32)
    # TODO(synk): revert this fold when the real (nonlinear) MolGCN replaces
    # the linear stand-in.
    w01 = wg_f @ params["w1"].astype(f32)                         # [x_dim, dg]
    b01 = bg_f @ params["w1"].astype(f32) + params["b1"].astype(f32)

    # --- operands: x stays UNPADDED on the lane axis --------------------------
    x_p = _pad2(x.astype(f32), n_pad, x_dim).astype(jnp.bfloat16)
    seg_p = jnp.full((1, n_pad), -1, jnp.int32).at[0, :n].set(
        batch_idx.astype(jnp.int32))
    w01_p = _pad2(w01, x_dim, d_pad).astype(jnp.bfloat16)
    b01_p = _pad2(b01, 1, d_pad)
    w2_p = _pad2(params["w2"].astype(f32), d_pad, d_pad).astype(jnp.bfloat16)
    b2_p = _pad2(params["b2"].astype(f32), 1, d_pad)

    const = lambda shp: pl.BlockSpec(shp, lambda c, i: (0,) * len(shp))

    out_parts = pl.pallas_call(
        _fused_kernel,
        out_shape=jax.ShapeDtypeStruct((cores_split, g_pad, d_pad), f32),
        grid=(cores_split, tiles_per_core),
        in_specs=[
            pl.BlockSpec((tile_n, x_dim),
                         lambda c, i: (c * tiles_per_core + i, 0)),     # x
            pl.BlockSpec((1, tile_n),
                         lambda c, i: (0, c * tiles_per_core + i)),     # batch idx
            const((x_dim, d_pad)),                                      # W01 (folded)
            const((1, d_pad)),                                          # b01
            const((d_pad, d_pad)),                                      # W2
            const((1, d_pad)),                                          # b2
        ],
        out_specs=pl.BlockSpec((None, g_pad, d_pad), lambda c, i: (c, 0, 0)),
        compiler_params=pltpu.CompilerParams(
            dimension_semantics=("parallel", "arbitrary"),
            vmem_limit_bytes=vmem_limit),
    )(x_p, seg_p, w01_p, b01_p, w2_p, b2_p)

    # Sum per-core partial pooled slabs, slice away padding.
    return out_parts.sum(axis=0)[:num_graphs, :dg]


def make_params(key, x_dim, edge_attr_dim, k_total, graph_embedding_dim):
    ks = jax.random.split(key, 14)
    u = lambda k, shp, s=0.2: jax.random.uniform(k, shp, jnp.float32, -s, s)
    return {
        # BatchNorm1d(x_dim)
        "node_bn_gamma": 1.0 + u(ks[0], (x_dim,)),
        "node_bn_beta": u(ks[1], (x_dim,)),
        "node_bn_rm": u(ks[2], (x_dim,)),
        "node_bn_rv": 1.0 + jnp.abs(u(ks[3], (x_dim,))),
        # BatchNorm1d(edge_attr_dim) -- kept for module parity (feeds MolGCN)
        "edge_bn_gamma": 1.0 + u(ks[4], (edge_attr_dim,)),
        "edge_bn_beta": u(ks[5], (edge_attr_dim,)),
        "edge_bn_rm": u(ks[6], (edge_attr_dim,)),
        "edge_bn_rv": 1.0 + jnp.abs(u(ks[7], (edge_attr_dim,))),
        # GNN stand-in projection x_dim -> k_total
        "wg": u(ks[8], (x_dim, k_total), 0.5),
        "bg": u(ks[9], (1, k_total), 0.1),
        # graph_embedding_lin1: k_total -> graph_embedding_dim
        "w1": u(ks[10], (k_total, graph_embedding_dim), 0.5),
        "b1": u(ks[11], (1, graph_embedding_dim), 0.1),
        # graph_embedding_lin2: graph_embedding_dim -> graph_embedding_dim
        "w2": u(ks[12], (graph_embedding_dim, graph_embedding_dim), 0.5),
        "b2": u(ks[13], (1, graph_embedding_dim), 0.1),
    }


if __name__ == "__main__":
    key = jax.random.PRNGKey(0)
    # small, module-consistent shapes
    x_dim = 5
    edge_attr_dim = 1
    graph_embedding_dim = 5
    # num_kernel{1..4}_Nhop = (2, 3, 4, 5) -> GNN output width
    k_total = 2 + 3 + 4 + 5
    n_nodes = 16
    n_edges = 24
    num_graphs = 2

    k_x, k_e, k_p = jax.random.split(key, 3)
    x = jax.random.normal(k_x, (n_nodes, x_dim), jnp.float32)
    edge_attr = jax.random.normal(k_e, (n_edges, edge_attr_dim), jnp.float32)
    batch_idx = jnp.concatenate(
        [jnp.zeros((n_nodes // 2,), jnp.int32),
         jnp.ones((n_nodes - n_nodes // 2,), jnp.int32)])
    assert int(batch_idx.max()) < num_graphs

    params = make_params(k_p, x_dim, edge_attr_dim, k_total,
                         graph_embedding_dim)

    fwd = jax.jit(functools.partial(mol_kgnn_forward, num_graphs=num_graphs,
                                    params=params))
    out = fwd(x, edge_attr, batch_idx)
    out = jax.block_until_ready(out)
    assert out.shape == (num_graphs, graph_embedding_dim)
    assert bool(jnp.all(jnp.isfinite(out)))
    print("KERNEL_OK")
</pallas_src>

<mosaic_0001>
module attributes {stable_mosaic.version = 11 : i64} {
  func.func @_fused_kernel(%arg0: i32, %arg1: i32, %arg2: memref<16x5xbf16, #tpu.memory_space<vmem>>, %arg3: memref<1x16xi32, #tpu.memory_space<vmem>>, %arg4: memref<5x128xbf16, #tpu.memory_space<vmem>>, %arg5: memref<1x128xf32, #tpu.memory_space<vmem>>, %arg6: memref<128x128xbf16, #tpu.memory_space<vmem>>, %arg7: memref<1x128xf32, #tpu.memory_space<vmem>>, %arg8: memref<1x8x128xf32, #tpu.memory_space<vmem>>) attributes {dimension_semantics = [#tpu.dimension_semantics<parallel>, #tpu.dimension_semantics<arbitrary>], iteration_bounds = array<i64: 1, 1>, scalar_prefetch = 0 : i64, scratch_operands = 0 : i64, tpu.core_type = #tpu.core_type<tc>, window_params = [{transform_indices = @transform_0, window_bounds = array<i64: 16, 5>}, {transform_indices = @transform_1, window_bounds = array<i64: 1, 16>}, {pipeline_mode = #tpu.pipeline_mode<synchronous>, transform_indices = @transform_2, window_bounds = array<i64: 5, 128>}, {pipeline_mode = #tpu.pipeline_mode<synchronous>, transform_indices = @transform_3, window_bounds = array<i64: 1, 128>}, {pipeline_mode = #tpu.pipeline_mode<synchronous>, transform_indices = @transform_4, window_bounds = array<i64: 128, 128>}, {pipeline_mode = #tpu.pipeline_mode<synchronous>, transform_indices = @transform_5, window_bounds = array<i64: 1, 128>}, {transform_indices = @transform_6, window_bounds = array<i64: 1, 8, 128>}]} {
    %c0_i32 = arith.constant 0 : i32
    %0 = arith.cmpi eq, %arg1, %c0_i32 : i32
    %1 = arith.extui %0 : i1 to i32
    %c0_i32_0 = arith.constant 0 : i32
    %2 = arith.cmpi ne, %1, %c0_i32_0 : i32
    scf.if %2 {
      %cst_21 = arith.constant 0.000000e+00 : f32
      %34 = vector.broadcast %cst_21 : f32 to vector<8x128xf32>
      %c0_22 = arith.constant 0 : index
      %c0_23 = arith.constant 0 : index
      %c0_24 = arith.constant 0 : index
      %35 = vector.load %arg8[%c0_22, %c0_23, %c0_24] : memref<1x8x128xf32, #tpu.memory_space<vmem>>, vector<1x8x128xf32>
      %36 = vector.shape_cast %35 : vector<1x8x128xf32> to vector<8x128xf32>
      %37 = vector.shape_cast %34 : vector<8x128xf32> to vector<1x8x128xf32>
      tpu.vector_store %arg8[%c0_22, %c0_23, %c0_24], %37 {strides = array<i32>} : memref<1x8x128xf32, #tpu.memory_space<vmem>>, vector<1x8x128xf32>,
    } else {
    }
    %c0 = arith.constant 0 : index
    %c0_1 = arith.constant 0 : index
    %3 = vector.load %arg2[%c0, %c0_1] : memref<16x5xbf16, #tpu.memory_space<vmem>>, vector<16x5xbf16>
    %c0_2 = arith.constant 0 : index
    %c0_3 = arith.constant 0 : index
    %4 = vector.load %arg4[%c0_2, %c0_3] : memref<5x128xbf16, #tpu.memory_space<vmem>>, vector<5x128xbf16>
    %cst = arith.constant dense<0.000000e+00> : vector<16x128xf32>
    %5 = tpu.matmul %3, %4, %cst {dimension_numbers = #tpu.dot_dimension_numbers<[1], [0], [0], [1], [0, 0, 1, 1], [], []>} : vector<16x5xbf16>, vector<5x128xbf16>, vector<16x128xf32> -> vector<16x128xf32>
    %c0_4 = arith.constant 0 : index
    %c0_5 = arith.constant 0 : index
    %6 = vector.load %arg5[%c0_4, %c0_5] : memref<1x128xf32, #tpu.memory_space<vmem>>, vector<1x128xf32>
    %7 = vector.broadcast %6 : vector<1x128xf32> to vector<16x128xf32>
    %8 = arith.addf %5, %7 : vector<16x128xf32>
    %9 = arith.negf %8 : vector<16x128xf32>
    %10 = math.exp %9 : vector<16x128xf32>
    %cst_6 = arith.constant 1.000000e+00 : f32
    %11 = vector.broadcast %cst_6 : f32 to vector<16x128xf32>
    %12 = arith.addf %11, %10 : vector<16x128xf32>
    %13 = arith.divf %11, %12 : vector<16x128xf32>
    %14 = arith.mulf %8, %13 : vector<16x128xf32>
    %15 = arith.truncf %14 : vector<16x128xf32> to vector<16x128xbf16>
    %c0_7 = arith.constant 0 : index
    %c0_8 = arith.constant 0 : index
    %16 = vector.load %arg6[%c0_7, %c0_8] : memref<128x128xbf16, #tpu.memory_space<vmem>>, vector<128x128xbf16>
    %cst_9 = arith.constant dense<0.000000e+00> : vector<16x128xf32>
    %17 = tpu.matmul %15, %16, %cst_9 {dimension_numbers = #tpu.dot_dimension_numbers<[1], [0], [0], [1], [0, 0, 1, 1], [], []>} : vector<16x128xbf16>, vector<128x128xbf16>, vector<16x128xf32> -> vector<16x128xf32>
    %c0_10 = arith.constant 0 : index
    %c0_11 = arith.constant 0 : index
    %18 = vector.load %arg7[%c0_10, %c0_11] : memref<1x128xf32, #tpu.memory_space<vmem>>, vector<1x128xf32>
    %19 = vector.broadcast %18 : vector<1x128xf32> to vector<16x128xf32>
    %20 = arith.addf %17, %19 : vector<16x128xf32>
    %c0_12 = arith.constant 0 : index
    %c0_13 = arith.constant 0 : index
    %21 = vector.load %arg3[%c0_12, %c0_13] : memref<1x16xi32, #tpu.memory_space<vmem>>, vector<1x16xi32>
    %22 = tpu.iota {dimensions = array<i32: 0>} : vector<8x16xi32>
    %23 = vector.broadcast %21 : vector<1x16xi32> to vector<8x16xi32>
    %24 = arith.cmpi eq, %23, %22 : vector<8x16xi32>
    %25 = arith.extui %24 : vector<8x16xi1> to vector<8x16xi32>
    %26 = arith.sitofp %25 : vector<8x16xi32> to vector<8x16xf32>
    %c0_14 = arith.constant 0 : index
    %c0_15 = arith.constant 0 : index
    %c0_16 = arith.constant 0 : index
    %27 = vector.load %arg8[%c0_14, %c0_15, %c0_16] : memref<1x8x128xf32, #tpu.memory_space<vmem>>, vector<1x8x128xf32>
    %28 = vector.shape_cast %27 : vector<1x8x128xf32> to vector<8x128xf32>
    %cst_17 = arith.constant dense<0.000000e+00> : vector<8x128xf32>
    %29 = tpu.matmul %26, %20, %cst_17 {dimension_numbers = #tpu.dot_dimension_numbers<[1], [0], [0], [1], [0, 0, 1, 1], [], []>} : vector<8x16xf32>, vector<16x128xf32>, vector<8x128xf32> -> vector<8x128xf32>
    %30 = arith.addf %28, %29 : vector<8x128xf32>
    %c0_18 = arith.constant 0 : index
    %c0_19 = arith.constant 0 : index
    %c0_20 = arith.constant 0 : index
    %31 = vector.load %arg8[%c0_18, %c0_19, %c0_20] : memref<1x8x128xf32, #tpu.memory_space<vmem>>, vector<1x8x128xf32>
    %32 = vector.shape_cast %31 : vector<1x8x128xf32> to vector<8x128xf32>
    %33 = vector.shape_cast %30 : vector<8x128xf32> to vector<1x8x128xf32>
    tpu.vector_store %arg8[%c0_18, %c0_19, %c0_20], %33 {strides = array<i32>} : memref<1x8x128xf32, #tpu.memory_space<vmem>>, vector<1x8x128xf32>,
    return
  }
  func.func @transform_0(%arg0: i32, %arg1: i32) -> (i32, i32) {
    %c1_i32 = arith.constant 1 : i32
    %0 = arith.muli %arg0, %c1_i32 : i32
    %1 = arith.addi %0, %arg1 : i32
    %c0_i32 = arith.constant 0 : i32
    %c0_i32_0 = arith.constant 0 : i32
    return %1, %c0_i32 : i32, i32
  }
  func.func @transform_1(%arg0: i32, %arg1: i32) -> (i32, i32) {
    %c1_i32 = arith.constant 1 : i32
    %0 = arith.muli %arg0, %c1_i32 : i32
    %1 = arith.addi %0, %arg1 : i32
    %c0_i32 = arith.constant 0 : i32
    %c0_i32_0 = arith.constant 0 : i32
    return %c0_i32, %1 : i32, i32
  }
  func.func @transform_2(%arg0: i32, %arg1: i32) -> (i32, i32) {
    %c0_i32 = arith.constant 0 : i32
    %c0_i32_0 = arith.constant 0 : i32
    %c0_i32_1 = arith.constant 0 : i32
    return %c0_i32, %c0_i32_0 : i32, i32
  }
  func.func @transform_3(%arg0: i32, %arg1: i32) -> (i32, i32) {
    %c0_i32 = arith.constant 0 : i32
    %c0_i32_0 = arith.constant 0 : i32
    %c0_i32_1 = arith.constant 0 : i32
    return %c0_i32, %c0_i32_0 : i32, i32
  }
  func.func @transform_4(%arg0: i32, %arg1: i32) -> (i32, i32) {
    %c0_i32 = arith.constant 0 : i32
    %c0_i32_0 = arith.constant 0 : i32
    %c0_i32_1 = arith.constant 0 : i32
    return %c0_i32, %c0_i32_0 : i32, i32
  }
  func.func @transform_5(%arg0: i32, %arg1: i32) -> (i32, i32) {
    %c0_i32 = arith.constant 0 : i32
    %c0_i32_0 = arith.constant 0 : i32
    %c0_i32_1 = arith.constant 0 : i32
    return %c0_i32, %c0_i32_0 : i32, i32
  }
  func.func @transform_6(%arg0: i32, %arg1: i32) -> (i32, i32, i32) {
    %c0_i32 = arith.constant 0 : i32
    %c0_i32_0 = arith.constant 0 : i32
    %c0_i32_1 = arith.constant 0 : i32
    return %arg0, %c0_i32, %c0_i32_0 : i32, i32, i32
  }
}

</mosaic_0001>

<llo_original>
// kernel: mol_kgnn_forward.1
$region0: #{mol_kgnn_forward.1}
  #allocation0 [shape = 'u32[]', space=smem, size = 0x4, offset = 0x4, fixed_abs, tag = 'smem constant byte address 0x4 - core index']
  #allocation1 [shape = 'u32[144,128]{1,0:T(1,128)}', space=vmem, size = 0x12000, scoped, tag = 'internal scratch']
  %s0 = inlined_call_operand.vmem [shape: bf16[16,5], index: 0, kind: input, shape index: {}]
  %s1 = inlined_call_operand.vmem [shape: s32[1,16], index: 1, kind: input, shape index: {}]
  %s2 = inlined_call_operand.vmem [shape: bf16[5,128], index: 2, kind: input, shape index: {}]
  %s3 = inlined_call_operand.vmem [shape: f32[1,128], index: 3, kind: input, shape index: {}]
  %s4 = inlined_call_operand.hbm [shape: bf16[128,128], index: 4, kind: input, shape index: {}]
  %s5 = inlined_call_operand.vmem [shape: f32[1,128], index: 5, kind: input, shape index: {}]
  %s6 = inlined_call_operand.vmem [shape: f32[1,8,128], index: 6, kind: output, shape index: {}]
  %s7 = sld [smem:[#allocation0]]
  $region42: #{mol_kgnn_forward.1} parent=0
    _
  %s9 = ssub.s32 1, %s7
  %s10 = scalar_select 0, %s9, %s7
  $region1: #{mol_kgnn_forward.1} parent=0
    #allocation2 [shape = 'u8[32768]{0}', space=vmem, size = 0x8000, scoped, tag = 'input window, operand 4, single buffered']
    #allocation3 [shape = 's32[1]{0}', space=sflag, size = 0x4, scoped, tag = 'scoped memory for mol_kgnn_forward.1']
    %11 = vsyncpa [#allocation3], 0
    // Predicated region
    $region2: #{mol_kgnn_forward.1} parent=1 // pred_check
      _
    $region3: #{mol_kgnn_forward.1} parent=1 // pred_check_branch
      %13 = sbr.rel (0) target = $region5
    $region4: #{mol_kgnn_forward.1} parent=1 // pred_region
      %s14 = sadd.s32 0, 0
      %s15 = smul.u32 2, %s14
      %p16 = scmp.lt.s32.totalorder %s15, 1
      %s17 = scalar_select %p16, %s15, 1
      %s18 = smul.addr %s17, 4
      %s19 = scalar_lea.vmem %s0, %s18
      %s20 = sadd.s32 0, 0
      %s21 = smul.u32 2, %s20
    $region5: #{mol_kgnn_forward.1} parent=1 // pred_fallthru
      _
    // Predicated region
    $region6: #{mol_kgnn_forward.1} parent=1 // pred_check
      _
    $region7: #{mol_kgnn_forward.1} parent=1 // pred_check_branch
      %23 = sbr.rel (0) target = $region9
    $region8: #{mol_kgnn_forward.1} parent=1 // pred_region
      %s24 = sadd.s32 0, 0
      %p25 = scmp.lt.s32.totalorder %s24, 0
      %s26 = scalar_select %p25, %s24, 0
      %s27 = scalar_lea.vmem %s1, %s26
      %s28 = sadd.s32 0, 0
    $region9: #{mol_kgnn_forward.1} parent=1 // pred_fallthru
      _
    // Predicated region
    $region10: #{mol_kgnn_forward.1} parent=1 // pred_check
      _
    $region11: #{mol_kgnn_forward.1} parent=1 // pred_check_branch
      %30 = sbr.rel (0) target = $region13
    $region12: #{mol_kgnn_forward.1} parent=1 // pred_region
      _
    $region13: #{mol_kgnn_forward.1} parent=1 // pred_fallthru
      _
    // Predicated region
    $region14: #{mol_kgnn_forward.1} parent=1 // pred_check
      _
    $region15: #{mol_kgnn_forward.1} parent=1 // pred_check_branch
      %32 = sbr.rel (0) target = $region17
    $region16: #{mol_kgnn_forward.1} parent=1 // pred_region
      _
    $region17: #{mol_kgnn_forward.1} parent=1 // pred_fallthru
      _
    // Predicated region
    $region18: #{mol_kgnn_forward.1} parent=1 // pred_check
      _
    $region19: #{mol_kgnn_forward.1} parent=1 // pred_check_branch
      %34 = sbr.rel (0) target = $region21
    $region20: #{mol_kgnn_forward.1} parent=1 // pred_region
      %s36 = ssub.s32 1024, 1024
      %37 = vsyncadd [#allocation3], %s36
      %s38 = sshll.u32 [#allocation2], 4
      %s39 = int_to_ptr.vmem [resolvable:$true] %s38
      %44 = dma.hbm_to_vmem [thread:$0]  %s4, 1024, %s39, [#allocation3], 64, 64, 4
    $region21: #{mol_kgnn_forward.1} parent=1 // pred_fallthru
      _
    // Predicated region
    $region22: #{mol_kgnn_forward.1} parent=1 // pred_check
      _
    $region23: #{mol_kgnn_forward.1} parent=1 // pred_check_branch
      %46 = sbr.rel (0) target = $region25
    $region24: #{mol_kgnn_forward.1} parent=1 // pred_region
      _
    $region25: #{mol_kgnn_forward.1} parent=1 // pred_fallthru
      _
    // Predicated region
    $region26: #{mol_kgnn_forward.1} parent=1 // pred_check
      _
    $region27: #{mol_kgnn_forward.1} parent=1 // pred_check_branch
      %48 = sbr.rel (0) target = $region29
    $region28: #{mol_kgnn_forward.1} parent=1 // pred_region
      %49 = dma.done [#allocation3], 1024
    $region29: #{mol_kgnn_forward.1} parent=1 // pred_fallthru
      _
    %s50 = sadd.s32 0, 0
    %s51 = smul.u32 2, %s50
    %p52 = scmp.lt.s32.totalorder %s51, 1
    %s53 = scalar_select %p52, %s51, 1
    %s54 = smul.addr %s53, 4
    %s55 = scalar_lea.vmem %s0, %s54
    %s56 = sadd.s32 0, 0
    %p57 = scmp.lt.s32.totalorder %s56, 0
    %s58 = scalar_select %p57, %s56, 0
    %s59 = scalar_lea.vmem %s1, %s58
    %s60 = sadd.s32 0, 0
    %s61 = smul.u32 2, %s60
    %p62 = scmp.lt.s32.totalorder %s61, 1
    %s63 = scalar_select %p62, %s61, 1
    %s64 = smul.addr %s63, 4
    %s65 = scalar_lea.vmem %s0, %s64
    %s66 = sadd.s32 0, 0
    %s67 = smul.u32 2, %s66
    %s68 = sadd.s32 0, 0
    %p69 = scmp.lt.s32.totalorder %s68, 0
    %s70 = scalar_select %p69, %s68, 0
    %s71 = scalar_lea.vmem %s1, %s70
    %s72 = sadd.s32 0, 0
    %p74 = scmp.eq.s32.totalorder 0, 0
    // Predicated region
    $region30: #{mol_kgnn_forward.1} parent=1 // pred_check
      %p75 = pneg %p74
    $region31: #{mol_kgnn_forward.1} parent=1 // pred_check_branch
      %77 = sbr.rel (%p75) target = $region33
    $region32: #{mol_kgnn_forward.1} parent=1 // pred_region
      %78 = vst [vmem:[%s6] sm:$0xff] 0.0
    $region33: #{mol_kgnn_forward.1} parent=1 // pred_fallthru
      _
    %v79 = vld [vmem:[%s65] sm:$0xf]
    %v80 = vld [vmem:[%s65 + $0x4] sm:$0xf]
    %v81 = vld [vmem:[%s2] sm:$0x7]
    %v82 = vld [vmem:[%s3] sm:$0x1]
    %v84 = vlaneseq
    %v85 = vshrl.u32 %v84, 7
    %v86 = vsub.s32 0, %v85
    %v87 = vrot.slane %v82, %v86
    %v91 = vunpack.c.l.b16 %v79
    %v92 = vunpack.c.l.b16 %v80
    %v93 = vpack.c.b16 %v92, %v91
    %vm94 = vcmask 39936
    %v96 = vsel %vm94, %v93, 0
    %vm98 = vcmask 1041408
    %vm99 = vcmask 1042432
    %v100 = vsel %vm98, 4294967295, 65535
    %v101 = vsel %vm99, %v100, 0
    %v103 = vand.u32 %v81, %v101
    %105 = vmatprep.subr.bf16.mxu0 0
    %106 = vmatpush1.bf16.msra.mxu0 %v103
    %107 = vmatprep.subr.bf16.mxu0 0
    %108 = vmatpush1.bf16.msra.mxu0 0
    %109 = vmatprep.subr.bf16.mxu0 0
    %110 = vmatpush1.bf16.msra.mxu0 0
    %111 = vmatprep.subr.bf16.mxu0 0
    %112 = vmatpush1.bf16.msra.mxu0 0
    %113 = vmatprep.subr.bf16.mxu0 0
    %114 = vmatpush1.bf16.msra.mxu0 0
    %115 = vmatprep.subr.bf16.mxu0 0
    %116 = vmatpush1.bf16.msra.mxu0 0
    %117 = vmatprep.subr.bf16.mxu0 0
    %118 = vmatpush1.bf16.msra.mxu0 0
    %119 = vmatprep.subr.bf16.mxu0 0
    %120 = vmatpush1.bf16.msra.mxu0 0
    %121 = vmatprep.subr.bf16.mxu0 0
    %122 = vmatpush1.bf16.msra.mxu0 0
    %123 = vmatprep.subr.bf16.mxu0 0
    %124 = vmatpush1.bf16.msra.mxu0 0
    %125 = vmatprep.subr.bf16.mxu0 0
    %126 = vmatpush1.bf16.msra.mxu0 0
    %127 = vmatprep.subr.bf16.mxu0 0
    %128 = vmatpush1.bf16.msra.mxu0 0
    %129 = vmatprep.subr.bf16.mxu0 0
    %130 = vmatpush1.bf16.msra.mxu0 0
    %131 = vmatprep.subr.bf16.mxu0 0
    %132 = vmatpush1.bf16.msra.mxu0 0
    %133 = vmatprep.subr.bf16.mxu0 0
    %134 = vmatpush1.bf16.msra.mxu0 0
    %135 = vmatprep.subr.bf16.mxu0 0
    %136 = vmatpush1.bf16.msra.mxu0 0
    %137 = vmatprep.mubr.bf16.mxu0 0
    %138 = vmatmul.mubr.bf16.gmra.mrb[0].mxu0 %v96
    %v139 = vpop.f32.mrb[0].mxu0
    %v140 = vadd.f32 %v87, %v139
    %v141 = vpop.f32.mrb[0].mxu0
    %v142 = vpop.f32.mrb[0].mxu0
    %v143 = vadd.f32 %v87, %v142
    %v144 = vpop.f32.mrb[0].mxu0
    %145 = vdwg.mxu0
    %v146 = vxor.u32 %v140, 2147483648
    %v147 = vxor.u32 %v143, 2147483648
    %v148 = vmul.f32 %v146, 1.442695
    %v149 = vpow.pop %v148
    %v150 = vmul.f32 %v147, 1.442695
    %v151 = vpow.pop %v150
    %v152 = vadd.f32 %v149, 1.0
    %v153 = vadd.f32 %v151, 1.0
    %v154 = vrcp.pop %v152
    %v155 = vmul.f32 1.0, %v154
    %v156 = vrcp.pop %v153
    %v157 = vmul.f32 1.0, %v156
    %v158 = vmul.f32 %v140, %v155
    %v159 = vmul.f32 %v143, %v157
    %v160 = vpack.c.bf16 %v159, %v158
    %v161 = vld [vmem:[#allocation2] sm:$0xf]
    %v162 = vld [vmem:[#allocation2 + $0x4] sm:$0xf]
    %v163 = vld [vmem:[#allocation2 + $0x8] sm:$0xf]
    %v164 = vld [vmem:[#allocation2 + $0xc] sm:$0xf]
    %v165 = vld [vmem:[#allocation2 + $0x10] sm:$0xf]
    %v166 = vld [vmem:[#allocation2 + $0x14] sm:$0xf]
    %v167 = vld [vmem:[#allocation2 + $0x18] sm:$0xf]
    %v168 = vld [vmem:[#allocation2 + $0x1c] sm:$0xf]
    %v169 = vld [vmem:[#allocation2 + $0x20] sm:$0xf]
    %v170 = vld [vmem:[#allocation2 + $0x24] sm:$0xf]
    %v171 = vld [vmem:[#allocation2 + $0x28] sm:$0xf]
    %v172 = vld [vmem:[#allocation2 + $0x2c] sm:$0xf]
    %v173 = vld [vmem:[#allocation2 + $0x30] sm:$0xf]
    %v174 = vld [vmem:[#allocation2 + $0x34] sm:$0xf]
    %v175 = vld [vmem:[#allocation2 + $0x38] sm:$0xf]
    %v176 = vld [vmem:[#allocation2 + $0x3c] sm:$0xf]
    %v177 = vld [vmem:[%s5] sm:$0x1]
    %v179 = vlaneseq
    %v180 = vshrl.u32 %v179, 7
    %v181 = vsub.s32 0, %v180
    %v182 = vrot.slane %v177, %v181
    %v200 = vunpack.c.l.b16 %v161
    %v201 = vunpack.c.l.b16 %v162
    %v202 = vunpack.c.l.b16 %v163
    %v203 = vunpack.c.l.b16 %v164
    %v204 = vunpack.c.l.b16 %v165
    %v205 = vunpack.c.l.b16 %v166
    %v206 = vunpack.c.l.b16 %v167
    %v207 = vunpack.c.l.b16 %v168
    %v208 = vunpack.c.l.b16 %v169
    %v209 = vunpack.c.l.b16 %v170
    %v210 = vunpack.c.l.b16 %v171
    %v211 = vunpack.c.l.b16 %v172
    %v212 = vunpack.c.l.b16 %v173
    %v213 = vunpack.c.l.b16 %v174
    %v214 = vunpack.c.l.b16 %v175
    %v215 = vunpack.c.l.b16 %v176
    %v216 = vpack.c.b16 %v201, %v200
    %v217 = vpack.c.b16 %v203, %v202
    %v218 = vpack.c.b16 %v205, %v204
    %v219 = vpack.c.b16 %v207, %v206
    %v220 = vpack.c.b16 %v209, %v208
    %v221 = vpack.c.b16 %v211, %v210
    %v222 = vpack.c.b16 %v213, %v212
    %v223 = vpack.c.b16 %v215, %v214
    %232 = vmatprep.subr.bf16.mxu0 0
    %233 = vmatpush1.bf16.msra.mxu0 %v216
    %234 = vmatprep.subr.bf16.mxu0 0
    %235 = vmatpush1.bf16.msra.mxu0 %v217
    %236 = vmatprep.subr.bf16.mxu0 0
    %237 = vmatpush1.bf16.msra.mxu0 %v218
    %238 = vmatprep.subr.bf16.mxu0 0
    %239 = vmatpush1.bf16.msra.mxu0 %v219
    %240 = vmatprep.subr.bf16.mxu0 0
    %241 = vmatpush1.bf16.msra.mxu0 %v220
    %242 = vmatprep.subr.bf16.mxu0 0
    %243 = vmatpush1.bf16.msra.mxu0 %v221
    %244 = vmatprep.subr.bf16.mxu0 0
    %245 = vmatpush1.bf16.msra.mxu0 %v222
    %246 = vmatprep.subr.bf16.mxu0 0
    %247 = vmatpush1.bf16.msra.mxu0 %v223
    %248 = vmatprep.subr.bf16.mxu0 0
    %249 = vmatpush1.bf16.msra.mxu0 0
    %250 = vmatprep.subr.bf16.mxu0 0
    %251 = vmatpush1.bf16.msra.mxu0 0
    %252 = vmatprep.subr.bf16.mxu0 0
    %253 = vmatpush1.bf16.msra.mxu0 0
    %254 = vmatprep.subr.bf16.mxu0 0
    %255 = vmatpush1.bf16.msra.mxu0 0
    %256 = vmatprep.subr.bf16.mxu0 0
    %257 = vmatpush1.bf16.msra.mxu0 0
    %258 = vmatprep.subr.bf16.mxu0 0
    %259 = vmatpush1.bf16.msra.mxu0 0
    %260 = vmatprep.subr.bf16.mxu0 0
    %261 = vmatpush1.bf16.msra.mxu0 0
    %262 = vmatprep.subr.bf16.mxu0 0
    %263 = vmatpush1.bf16.msra.mxu0 0
    %264 = vmatprep.mubr.bf16.mxu0 0
    %265 = vmatmul.mubr.bf16.gmra.mrb[0].mxu0 %v160
    %v266 = vpop.f32.mrb[0].mxu0
    %v267 = vadd.f32 %v182, %v266
    %v268 = vpop.f32.mrb[0].mxu0
    %v269 = vpop.f32.mrb[0].mxu0
    %v270 = vadd.f32 %v182, %v269
    %v271 = vpop.f32.mrb[0].mxu0
    %272 = vdwg.mxu0
    %v273 = vld [vmem:[%s71] sm:$0x1]
    %v274 = vlaneseq
    %v275 = vshrl.u32 %v274, 7
    %v276 = vlaneseq
    %v277 = vshrl.u32 %v276, 7
    %v278 = vsub.s32 0, %v277
    %v279 = vrot.slane %v273, %v278
    %vm280 = vcmp.eq.s32.totalorder %v279, %v275
    %v281 = vsel %vm280, 1, 0
    %v282 = vcvt.s32.f32 %v281
    %v283 = vld [vmem:[%s6] sm:$0xff]
    %vm284 = vcmask 130048
    %v286 = vsel %vm284, %v282, 0
    %288 = vmatprep.subr.mxu0 0.0
    %289 = vmatpush1.msra.mxu0 %v267
    %290 = vmatprep.subr.mxu0 0.0
    %291 = vmatpush1.msra.mxu0 %v270
    %292 = vmatprep.subr.mxu0 0.0
    %293 = vmatpush1.msra.mxu0 0.0
    %294 = vmatprep.subr.mxu0 0.0
    %295 = vmatpush1.msra.mxu0 0.0
    %296 = vmatprep.subr.mxu0 0.0
    %297 = vmatpush1.msra.mxu0 0.0
    %298 = vmatprep.subr.mxu0 0.0
    %299 = vmatpush1.msra.mxu0 0.0
    %300 = vmatprep.subr.mxu0 0.0
    %301 = vmatpush1.msra.mxu0 0.0
    %302 = vmatprep.subr.mxu0 0.0
    %303 = vmatpush1.msra.mxu0 0.0
    %304 = vmatprep.subr.mxu0 0.0
    %305 = vmatpush1.msra.mxu0 0.0
    %306 = vmatprep.subr.mxu0 0.0
    %307 = vmatpush1.msra.mxu0 0.0
    %308 = vmatprep.subr.mxu0 0.0
    %309 = vmatpush1.msra.mxu0 0.0
    %310 = vmatprep.subr.mxu0 0.0
    %311 = vmatpush1.msra.mxu0 0.0
    %312 = vmatprep.subr.mxu0 0.0
    %313 = vmatpush1.msra.mxu0 0.0
    %314 = vmatprep.subr.mxu0 0.0
    %315 = vmatpush1.msra.mxu0 0.0
    %316 = vmatprep.subr.mxu0 0.0
    %317 = vmatpush1.msra.mxu0 0.0
    %318 = vmatprep.subr.mxu0 0.0
    %319 = vmatpush1.msra.mxu0 0.0
    %320 = vmatprep.subr.mxu0 0.0
    %321 = vmatpush1.msra.mxu0 0.0
    %322 = vmatprep.subr.mxu0 0.0
    %323 = vmatpush1.msra.mxu0 0.0
    %324 = vmatprep.subr.mxu0 0.0
    %325 = vmatpush1.msra.mxu0 0.0
    %326 = vmatprep.subr.mxu0 0.0
    %327 = vmatpush1.msra.mxu0 0.0
    %328 = vmatprep.subr.mxu0 0.0
    %329 = vmatpush1.msra.mxu0 0.0
    %330 = vmatprep.subr.mxu0 0.0
    %331 = vmatpush1.msra.mxu0 0.0
    %332 = vmatprep.subr.mxu0 0.0
    %333 = vmatpush1.msra.mxu0 0.0
    %334 = vmatprep.subr.mxu0 0.0
    %335 = vmatpush1.msra.mxu0 0.0
    %336 = vmatprep.subr.mxu0 0.0
    %337 = vmatpush1.msra.mxu0 0.0
    %338 = vmatprep.subr.mxu0 0.0
    %339 = vmatpush1.msra.mxu0 0.0
    %340 = vmatprep.subr.mxu0 0.0
    %341 = vmatpush1.msra.mxu0 0.0
    %342 = vmatprep.subr.mxu0 0.0
    %343 = vmatpush1.msra.mxu0 0.0
    %344 = vmatprep.subr.mxu0 0.0
    %345 = vmatpush1.msra.mxu0 0.0
    %346 = vmatprep.subr.mxu0 0.0
    %347 = vmatpush1.msra.mxu0 0.0
    %348 = vmatprep.subr.mxu0 0.0
    %349 = vmatpush1.msra.mxu0 0.0
    %350 = vmatprep.subr.mxu0 0.0
    %351 = vmatpush1.msra.mxu0 0.0
    %352 = vmatprep.mubr.f32.mxu0 0.0
    %353 = vmatmul.mubr.f32.gmra.mrb[0].mxu0 %v286
    %v354 = vpop.f32.mrb[0].mxu0
    %v355 = vadd.f32 0.0, %v354
    %v356 = vpop.f32.mrb[0].mxu0
    %357 = vdwg.mxu0
    %v358 = vadd.f32 %v283, %v355
    %359 = vst [vmem:[%s6] sm:$0xff] %v358
    // Predicated region
    $region34: #{mol_kgnn_forward.1} parent=1 // pred_check
      _
    $region35: #{mol_kgnn_forward.1} parent=1 // pred_check_branch
      %361 = sbr.rel (0) target = $region37
    $region36: #{mol_kgnn_forward.1} parent=1 // pred_region
      _
    $region37: #{mol_kgnn_forward.1} parent=1 // pred_fallthru
      _
    // Predicated region
    $region38: #{mol_kgnn_forward.1} parent=1 // pred_check
      _
    $region39: #{mol_kgnn_forward.1} parent=1 // pred_check_branch
      %363 = sbr.rel (0) target = $region41
    $region40: #{mol_kgnn_forward.1} parent=1 // pred_region
      _
    $region41: #{mol_kgnn_forward.1} parent=1 // pred_fallthru
      _
    %364 = vsyncpa [#allocation3], 1

</llo_original>
